<compile_context>
chip_gen: v7x
topology: tpu7x:2x2x1
jax: 0.10.0
libtpu: 0.0.40
codegen_flags: <defaults>
</compile_context>

<pallas_src>
import math
from functools import partial

import jax
import jax.numpy as jnp
from jax import lax
from jax.experimental import pallas as pl
from jax.experimental.pallas import tpu as pltpu


def _round_up(n, m):
    return ((n + m - 1) // m) * m


def _cdiv(a, b):
    return -(-a // b)


def _choose_tiling(b, max_tb):
    """Pick (tile_rows, padded_batch).

    tile_rows is a multiple of 128 (lane-dense output stores), there are >=2
    balanced tiles whenever the batch spans >=2 lane groups (v7x megacore), and
    padding stays bounded (exact-divisor tiles for small/medium batches, <~3%
    extra for very large batches).
    """
    b128 = _round_up(max(b, 1), 128)
    m = b128 // 128                       # number of 128-row lane groups
    max_t = max(max_tb // 128, 1)
    if m == 1:
        return 128, 128                   # single tile; nothing to shard
    if m <= 2 * max_t:
        # Exact-divisor tile: zero padding beyond the 128 round-up, >=2 tiles.
        t = max(d for d in range(1, min(max_t, m // 2) + 1) if m % d == 0)
        return 128 * t, b128
    # Huge batch: balance ceil(m / num_tiles) lane groups per tile.
    num_tiles = _cdiv(m, max_t)
    t = _cdiv(m, num_tiles)
    return 128 * t, num_tiles * 128 * t


def _disc_kernel(x_ref, w1t_ref, b1_ref, w2_ref, b2_ref, o_ref, *, reward):
    # Layer 1 on the MXU, batch-on-lanes: contract D on both operands.
    #   (H, D) x (TB, D) -> (H, TB)   -- no materialized transpose of x or h.
    h = lax.dot_general(
        w1t_ref[...], x_ref[...],
        dimension_numbers=(((1,), (1,)), ((), ())),
        preferred_element_type=jnp.float32)
    h = h + b1_ref[...]                        # (H, 1) bias broadcast over lanes
    h = 1.0 / (1.0 + jnp.exp(-h))              # exact sigmoid on lane-dense vregs
    # Layer 2 (Linear(H, 1)): (1, H) @ (H, TB) -> lane-dense (1, TB) row.
    o = jnp.dot(w2_ref[...], h, preferred_element_type=jnp.float32)
    o = o + b2_ref[0]                          # SMEM scalar bias
    if reward:
        # Fused GAIL reward epilogue: sigmoid(logit) - 1 (exact).
        o = 1.0 / (1.0 + jnp.exp(-o)) - 1.0
    o_ref[...] = o.astype(o_ref.dtype)


def _disc_pallas(x, w1t, b1_col, w2_row, b2_vec, *, max_tb, reward):
    b, d = x.shape
    hid = w1t.shape[0]

    tb, b_pad = _choose_tiling(b, max_tb)
    if b_pad != b:
        x = jnp.pad(x, ((0, b_pad - b), (0, 0)))
    grid = (b_pad // tb,)

    cost = pl.CostEstimate(
        flops=2 * b_pad * d * hid + 2 * b_pad * hid,
        transcendentals=b_pad * (hid + (1 if reward else 0)),
        bytes_accessed=4 * (b_pad * d + d * hid + 2 * hid + 1 + b_pad),
    )

    out = pl.pallas_call(
        partial(_disc_kernel, reward=reward),
        out_shape=jax.ShapeDtypeStruct((1, b_pad), jnp.float32),
        grid=grid,
        in_specs=[
            pl.BlockSpec((tb, d), lambda i: (i, 0)),             # x: pipelined tiles
            pl.BlockSpec((hid, d), lambda i: (0, 0)),            # W1^T: VMEM-resident
            pl.BlockSpec((hid, 1), lambda i: (0, 0)),            # b1 column: VMEM
            pl.BlockSpec((1, hid), lambda i: (0, 0)),            # W2 row: VMEM
            pl.BlockSpec(memory_space=pltpu.MemorySpace.SMEM),   # b2: SMEM scalar
        ],
        out_specs=pl.BlockSpec((1, tb), lambda i: (0, i)),        # lane-dense slab
        compiler_params=pltpu.CompilerParams(
            dimension_semantics=("parallel",)),
        cost_estimate=cost,
    )(x, w1t, b1_col, w2_row, b2_vec)

    # Layout plumbing only: lane-dense (1, B_pad) slab -> PyTorch's (B, 1).
    # Callers that can consume a flat (B,) / (1, B) result can skip this.
    return out.reshape(b_pad, 1)[:b]


def _prep_params(w1, b1, w2, b2):
    w1t = jnp.asarray(w1, jnp.float32).T                     # (D, H) -> (H, D)
    b1_col = jnp.asarray(b1, jnp.float32).reshape(-1, 1)     # (H, 1)
    w2_row = jnp.asarray(w2, jnp.float32).reshape(1, -1)     # (H, 1) -> (1, H)
    b2_vec = jnp.asarray(b2, jnp.float32).reshape(-1)        # (1,) for SMEM
    return w1t, b1_col, w2_row, b2_vec


# TODO(synk): if the caller can supply next_s in feature-major (D, B) layout,
# switch the x BlockSpec to (D, TB) tiles for fully lane-dense input DMA.

def discriminator_forward(x, w1, b1, w2, b2, *, max_block_b=4096):
    """Discriminator.forward: sigmoid(x @ W1 + b1) @ W2 + b2 -> (B, 1) logits."""
    w1t, b1_col, w2_row, b2_vec = _prep_params(w1, b1, w2, b2)
    return _disc_pallas(jnp.asarray(x, jnp.float32), w1t, b1_col, w2_row, b2_vec,
                        max_tb=max_block_b, reward=False)


def discriminator_reward(x, w1, b1, w2, b2, *, max_block_b=4096):
    """Discriminator.get_reward fused in-kernel: sigmoid(nets(x)) - 1 -> (B, 1)."""
    w1t, b1_col, w2_row, b2_vec = _prep_params(w1, b1, w2, b2)
    return _disc_pallas(jnp.asarray(x, jnp.float32), w1t, b1_col, w2_row, b2_vec,
                        max_tb=max_block_b, reward=True)


def init_params(key, state_dim, hidden=32):
    """Deterministic PyTorch-style (Kaiming-uniform-ish) Linear init."""
    k1, k2, k3, k4 = jax.random.split(key, 4)
    bound1 = 1.0 / math.sqrt(state_dim)
    bound2 = 1.0 / math.sqrt(hidden)
    w1 = jax.random.uniform(k1, (state_dim, hidden), jnp.float32, -bound1, bound1)
    b1 = jax.random.uniform(k2, (1, hidden), jnp.float32, -bound1, bound1)
    w2 = jax.random.uniform(k3, (hidden, 1), jnp.float32, -bound2, bound2)
    b2 = jax.random.uniform(k4, (1, 1), jnp.float32, -bound2, bound2)
    return w1, b1, w2, b2


def _reference(x, w1, b1, w2, b2):
    # HIGHEST-precision f32 reference (XLA's default f32 dot may use bf16 passes).
    pre = jnp.dot(x, w1, precision=jax.lax.Precision.HIGHEST) + b1.reshape(1, -1)
    h = 1.0 / (1.0 + jnp.exp(-pre))
    logits = jnp.dot(h, w2, precision=jax.lax.Precision.HIGHEST) + b2.reshape(1, 1)
    return logits, 1.0 / (1.0 + jnp.exp(-logits)) - 1.0


if __name__ == "__main__":
    key = jax.random.PRNGKey(0)
    k_x, k_x2, k_p = jax.random.split(key, 3)

    batch = 8          # small batch
    state_dim = 16     # np.prod(observation_space.shape)
    hidden = 32        # nn.Linear(state_dim, 32)

    w1, b1, w2, b2 = init_params(k_p, state_dim, hidden)

    # Small-batch check (single grid step, batch padded to one 128-row tile).
    x = jax.random.normal(k_x, (batch, state_dim), dtype=jnp.float32)
    logits = jax.block_until_ready(discriminator_forward(x, w1, b1, w2, b2))
    reward = jax.block_until_ready(discriminator_reward(x, w1, b1, w2, b2))
    ref_logits, ref_reward = _reference(x, w1, b1, w2, b2)
    assert logits.shape == (batch, 1)
    assert reward.shape == (batch, 1)
    assert jnp.allclose(logits, ref_logits, atol=2e-3, rtol=2e-3)
    assert jnp.allclose(reward, ref_reward, atol=2e-3, rtol=2e-3)

    # Multi-tile check (exercises padding + the >=2-tile "parallel" batch grid).
    batch2 = 300       # -> 3 tiles of 128, padding < 128 rows
    x2 = jax.random.normal(k_x2, (batch2, state_dim), dtype=jnp.float32)
    logits2 = jax.block_until_ready(discriminator_forward(x2, w1, b1, w2, b2))
    reward2 = jax.block_until_ready(discriminator_reward(x2, w1, b1, w2, b2))
    ref_logits2, ref_reward2 = _reference(x2, w1, b1, w2, b2)
    assert logits2.shape == (batch2, 1)
    assert jnp.allclose(logits2, ref_logits2, atol=2e-3, rtol=2e-3)
    assert jnp.allclose(reward2, ref_reward2, atol=2e-3, rtol=2e-3)

    print("KERNEL_OK")
</pallas_src>

<mosaic_0001>
module attributes {stable_mosaic.version = 11 : i64} {
  func.func @_disc_kernel(%arg0: i32, %arg1: memref<128x16xf32, #tpu.memory_space<vmem>>, %arg2: memref<32x16xf32, #tpu.memory_space<vmem>>, %arg3: memref<32x1xf32, #tpu.memory_space<vmem>>, %arg4: memref<1x32xf32, #tpu.memory_space<vmem>>, %arg5: memref<1xf32, #tpu.memory_space<smem>>, %arg6: memref<1x128xf32, #tpu.memory_space<vmem>>) attributes {dimension_semantics = [#tpu.dimension_semantics<parallel>], iteration_bounds = array<i64: 1>, scalar_prefetch = 0 : i64, scratch_operands = 0 : i64, tpu.core_type = #tpu.core_type<tc>, window_params = [{transform_indices = @transform_0, window_bounds = array<i64: 128, 16>}, {pipeline_mode = #tpu.pipeline_mode<synchronous>, transform_indices = @transform_1, window_bounds = array<i64: 32, 16>}, {pipeline_mode = #tpu.pipeline_mode<synchronous>, transform_indices = @transform_2, window_bounds = array<i64: 32, 1>}, {pipeline_mode = #tpu.pipeline_mode<synchronous>, transform_indices = @transform_3, window_bounds = array<i64: 1, 32>}, {transform_indices = @transform_4, window_bounds = array<i64: 1>}, {transform_indices = @transform_5, window_bounds = array<i64: 1, 128>}]} {
    %c0 = arith.constant 0 : index
    %c0_0 = arith.constant 0 : index
    %0 = vector.load %arg2[%c0, %c0_0] : memref<32x16xf32, #tpu.memory_space<vmem>>, vector<32x16xf32>
    %c0_1 = arith.constant 0 : index
    %c0_2 = arith.constant 0 : index
    %1 = vector.load %arg1[%c0_1, %c0_2] : memref<128x16xf32, #tpu.memory_space<vmem>>, vector<128x16xf32>
    %cst = arith.constant dense<0.000000e+00> : vector<32x128xf32>
    %2 = tpu.matmul %0, %1, %cst {dimension_numbers = #tpu.dot_dimension_numbers<[1], [1], [0], [0], [0, 0, 1, 0], [], []>} : vector<32x16xf32>, vector<128x16xf32>, vector<32x128xf32> -> vector<32x128xf32>
    %c0_3 = arith.constant 0 : index
    %c0_4 = arith.constant 0 : index
    %3 = vector.load %arg3[%c0_3, %c0_4] : memref<32x1xf32, #tpu.memory_space<vmem>>, vector<32x1xf32>
    %4 = vector.broadcast %3 : vector<32x1xf32> to vector<32x128xf32>
    %5 = arith.addf %2, %4 : vector<32x128xf32>
    %cst_5 = arith.constant 0.000000e+00 : f32
    %6 = vector.broadcast %cst_5 : f32 to vector<32x128xf32>
    %7 = arith.subf %6, %5 : vector<32x128xf32>
    %8 = math.exp %7 : vector<32x128xf32>
    %cst_6 = arith.constant 1.000000e+00 : f32
    %9 = vector.broadcast %cst_6 : f32 to vector<32x128xf32>
    %10 = arith.addf %9, %8 : vector<32x128xf32>
    %cst_7 = arith.constant 1.000000e+00 : f32
    %11 = vector.broadcast %cst_7 : f32 to vector<32x128xf32>
    %12 = arith.divf %11, %10 : vector<32x128xf32>
    %c0_8 = arith.constant 0 : index
    %c0_9 = arith.constant 0 : index
    %13 = vector.load %arg4[%c0_8, %c0_9] : memref<1x32xf32, #tpu.memory_space<vmem>>, vector<1x32xf32>
    %cst_10 = arith.constant dense<0.000000e+00> : vector<1x128xf32>
    %14 = tpu.matmul %13, %12, %cst_10 {dimension_numbers = #tpu.dot_dimension_numbers<[1], [0], [0], [1], [0, 0, 1, 1], [], []>} : vector<1x32xf32>, vector<32x128xf32>, vector<1x128xf32> -> vector<1x128xf32>
    %c0_11 = arith.constant 0 : index
    %15 = memref.load %arg5[%c0_11] : memref<1xf32, #tpu.memory_space<smem>>
    %16 = vector.broadcast %15 : f32 to vector<1x128xf32>
    %17 = arith.addf %14, %16 : vector<1x128xf32>
    %c0_12 = arith.constant 0 : index
    %c0_13 = arith.constant 0 : index
    %18 = vector.load %arg6[%c0_12, %c0_13] : memref<1x128xf32, #tpu.memory_space<vmem>>, vector<1x128xf32>
    tpu.vector_store %arg6[%c0_12, %c0_13], %17 {strides = array<i32>} : memref<1x128xf32, #tpu.memory_space<vmem>>, vector<1x128xf32>,
    return
  }
  func.func @transform_0(%arg0: i32) -> (i32, i32) {
    %c0_i32 = arith.constant 0 : i32
    %c0_i32_0 = arith.constant 0 : i32
    return %arg0, %c0_i32 : i32, i32
  }
  func.func @transform_1(%arg0: i32) -> (i32, i32) {
    %c0_i32 = arith.constant 0 : i32
    %c0_i32_0 = arith.constant 0 : i32
    %c0_i32_1 = arith.constant 0 : i32
    return %c0_i32, %c0_i32_0 : i32, i32
  }
  func.func @transform_2(%arg0: i32) -> (i32, i32) {
    %c0_i32 = arith.constant 0 : i32
    %c0_i32_0 = arith.constant 0 : i32
    %c0_i32_1 = arith.constant 0 : i32
    return %c0_i32, %c0_i32_0 : i32, i32
  }
  func.func @transform_3(%arg0: i32) -> (i32, i32) {
    %c0_i32 = arith.constant 0 : i32
    %c0_i32_0 = arith.constant 0 : i32
    %c0_i32_1 = arith.constant 0 : i32
    return %c0_i32, %c0_i32_0 : i32, i32
  }
  func.func @transform_4(%arg0: i32) -> i32 {
    %c0_i32 = arith.constant 0 : i32
    %c0_i32_0 = arith.constant 0 : i32
    return %c0_i32 : i32
  }
  func.func @transform_5(%arg0: i32) -> (i32, i32) {
    %c0_i32 = arith.constant 0 : i32
    %c0_i32_0 = arith.constant 0 : i32
    return %c0_i32, %arg0 : i32, i32
  }
}

</mosaic_0001>

<llo_original>
// kernel: tpu_custom_call.1
$region0: #{tpu_custom_call.1}
  #allocation0 [shape = 'u32[]', space=smem, size = 0x4, offset = 0x4, fixed_abs, tag = 'smem constant byte address 0x4 - core index']
  #allocation1 [shape = 'u32[144,128]{1,0:T(1,128)}', space=vmem, size = 0x12000, scoped, tag = 'internal scratch']
  #allocation2 [shape = 'f32[1]{0:T(128)S(6)}', space=smem, size = 0x200, scoped, tag = 'scoped memory for tpu_custom_call.1']
  %s0 = inlined_call_operand.vmem [shape: f32[128,16], index: 0, kind: input, shape index: {}]
  %s1 = inlined_call_operand.vmem [shape: f32[32,16], index: 1, kind: input, shape index: {}]
  %s2 = inlined_call_operand.vmem [shape: f32[32,1], index: 2, kind: input, shape index: {}]
  %s3 = inlined_call_operand.vmem [shape: f32[1,32], index: 3, kind: input, shape index: {}]
  %s4 = inlined_call_operand.<no memory space> [shape: f32[1], index: 4, kind: input, shape index: {}]
  %s5 = inlined_call_operand.hbm [shape: f32[1,128], index: 5, kind: output, shape index: {}]
  %s6 = sld [smem:[#allocation0]]
  $region30: #{tpu_custom_call.1} parent=0
    _
  %s8 = ssub.s32 1, %s6
  %s9 = scalar_select 0, %s8, %s6
  %10 = sst [smem:[#allocation2]] %s4
  $region1: #{tpu_custom_call.1} parent=0
    #allocation3 [shape = 'u8[512]{0}', space=vmem, size = 0x400, scoped, tag = 'output window, operand 0, single buffered']
    #allocation4 [shape = 's32[1]{0}', space=sflag, size = 0x4, scoped, tag = 'scoped memory for tpu_custom_call.1']
    %11 = vsyncpa [#allocation4], 0
    // Predicated region
    $region2: #{tpu_custom_call.1} parent=1 // pred_check
      _
    $region3: #{tpu_custom_call.1} parent=1 // pred_check_branch
      %13 = sbr.rel (0) target = $region5
    $region4: #{tpu_custom_call.1} parent=1 // pred_region
      _
    $region5: #{tpu_custom_call.1} parent=1 // pred_fallthru
      _
    // Predicated region
    $region6: #{tpu_custom_call.1} parent=1 // pred_check
      _
    $region7: #{tpu_custom_call.1} parent=1 // pred_check_branch
      %15 = sbr.rel (0) target = $region9
    $region8: #{tpu_custom_call.1} parent=1 // pred_region
      _
    $region9: #{tpu_custom_call.1} parent=1 // pred_fallthru
      _
    // Predicated region
    $region10: #{tpu_custom_call.1} parent=1 // pred_check
      _
    $region11: #{tpu_custom_call.1} parent=1 // pred_check_branch
      %17 = sbr.rel (0) target = $region13
    $region12: #{tpu_custom_call.1} parent=1 // pred_region
      _
    $region13: #{tpu_custom_call.1} parent=1 // pred_fallthru
      _
    // Predicated region
    $region14: #{tpu_custom_call.1} parent=1 // pred_check
      _
    $region15: #{tpu_custom_call.1} parent=1 // pred_check_branch
      %19 = sbr.rel (0) target = $region17
    $region16: #{tpu_custom_call.1} parent=1 // pred_region
      _
    $region17: #{tpu_custom_call.1} parent=1 // pred_fallthru
      _
    // Predicated region
    $region18: #{tpu_custom_call.1} parent=1 // pred_check
      _
    $region19: #{tpu_custom_call.1} parent=1 // pred_check_branch
      %21 = sbr.rel (0) target = $region21
    $region20: #{tpu_custom_call.1} parent=1 // pred_region
      _
    $region21: #{tpu_custom_call.1} parent=1 // pred_fallthru
      _
    %v22 = vld [vmem:[%s1] sm:$0xff]
    %v23 = vld [vmem:[%s1 + $0x8] sm:$0xff]
    %v24 = vld [vmem:[%s1 + $0x10] sm:$0xff]
    %v25 = vld [vmem:[%s1 + $0x18] sm:$0xff]
    %v26 = vld [vmem:[%s0] sm:$0xff]
    %v27 = vld [vmem:[%s0 + $0x8] sm:$0xff]
    %v28 = vld [vmem:[%s0 + $0x10] sm:$0xff]
    %v29 = vld [vmem:[%s0 + $0x18] sm:$0xff]
    %v30 = vld [vmem:[%s0 + $0x20] sm:$0xff]
    %v31 = vld [vmem:[%s0 + $0x28] sm:$0xff]
    %v32 = vld [vmem:[%s0 + $0x30] sm:$0xff]
    %v33 = vld [vmem:[%s0 + $0x38] sm:$0xff]
    %v34 = vld [vmem:[%s0 + $0x40] sm:$0xff]
    %v35 = vld [vmem:[%s0 + $0x48] sm:$0xff]
    %v36 = vld [vmem:[%s0 + $0x50] sm:$0xff]
    %v37 = vld [vmem:[%s0 + $0x58] sm:$0xff]
    %v38 = vld [vmem:[%s0 + $0x60] sm:$0xff]
    %v39 = vld [vmem:[%s0 + $0x68] sm:$0xff]
    %v40 = vld [vmem:[%s0 + $0x70] sm:$0xff]
    %v41 = vld [vmem:[%s0 + $0x78] sm:$0xff]
    %v42 = vld [vmem:[%s2] sm:$0xff]
    %v43 = vld [vmem:[%s2 + $0x8] sm:$0xff]
    %v44 = vld [vmem:[%s2 + $0x10] sm:$0xff]
    %v45 = vld [vmem:[%s2 + $0x18] sm:$0xff]
    %47 = vset.pattern.permute.xlu0 0
    %48 = vperm.xlu0 %47, %v42
    %v49 = vpop.permute.xlu0 %48
    %52 = vset.pattern.permute.xlu0 0
    %53 = vperm.xlu0 %52, %v43
    %v54 = vpop.permute.xlu0 %53
    %57 = vset.pattern.permute.xlu0 0
    %58 = vperm.xlu0 %57, %v44
    %v59 = vpop.permute.xlu0 %58
    %62 = vset.pattern.permute.xlu0 0
    %63 = vperm.xlu0 %62, %v45
    %v64 = vpop.permute.xlu0 %63
    %vm66 = vcmask 130048
    %v68 = vsel %vm66, %v22, 0
    %v71 = vsel %vm66, %v23, 0
    %v74 = vsel %vm66, %v24, 0
    %v77 = vsel %vm66, %v25, 0
    %v80 = vsel %vm66, %v26, 0
    %v83 = vsel %vm66, %v27, 0
    %v86 = vsel %vm66, %v28, 0
    %v89 = vsel %vm66, %v29, 0
    %v92 = vsel %vm66, %v30, 0
    %v95 = vsel %vm66, %v31, 0
    %v98 = vsel %vm66, %v32, 0
    %v101 = vsel %vm66, %v33, 0
    %v104 = vsel %vm66, %v34, 0
    %v107 = vsel %vm66, %v35, 0
    %v110 = vsel %vm66, %v36, 0
    %v113 = vsel %vm66, %v37, 0
    %v116 = vsel %vm66, %v38, 0
    %v119 = vsel %vm66, %v39, 0
    %v122 = vsel %vm66, %v40, 0
    %v125 = vsel %vm66, %v41, 0
    %127 = vmatprep.subr.mxu0 0.0
    %128 = vmatpush1.xpose.msra.mxu0 %v80
    %129 = vmatprep.subr.mxu0 0.0
    %130 = vmatpush1.xpose.msra.mxu0 %v83
    %131 = vmatprep.subr.mxu0 0.0
    %132 = vmatpush1.xpose.msra.mxu0 %v86
    %133 = vmatprep.subr.mxu0 0.0
    %134 = vmatpush1.xpose.msra.mxu0 %v89
    %135 = vmatprep.subr.mxu0 0.0
    %136 = vmatpush1.xpose.msra.mxu0 %v92
    %137 = vmatprep.subr.mxu0 0.0
    %138 = vmatpush1.xpose.msra.mxu0 %v95
    %139 = vmatprep.subr.mxu0 0.0
    %140 = vmatpush1.xpose.msra.mxu0 %v98
    %141 = vmatprep.subr.mxu0 0.0
    %142 = vmatpush1.xpose.msra.mxu0 %v101
    %143 = vmatprep.subr.mxu0 0.0
    %144 = vmatpush1.xpose.msra.mxu0 %v104
    %145 = vmatprep.subr.mxu0 0.0
    %146 = vmatpush1.xpose.msra.mxu0 %v107
    %147 = vmatprep.subr.mxu0 0.0
    %148 = vmatpush1.xpose.msra.mxu0 %v110
    %149 = vmatprep.subr.mxu0 0.0
    %150 = vmatpush1.xpose.msra.mxu0 %v113
    %151 = vmatprep.subr.mxu0 0.0
    %152 = vmatpush1.xpose.msra.mxu0 %v116
    %153 = vmatprep.subr.mxu0 0.0
    %154 = vmatpush1.xpose.msra.mxu0 %v119
    %155 = vmatprep.subr.mxu0 0.0
    %156 = vmatpush1.xpose.msra.mxu0 %v122
    %157 = vmatprep.subr.mxu0 0.0
    %158 = vmatpush1.xpose.msra.mxu0 %v125
    %159 = vmatprep.subr.mxu0 0.0
    %160 = vmatpush1.xpose.msra.mxu0 0.0
    %161 = vmatprep.subr.mxu0 0.0
    %162 = vmatpush1.xpose.msra.mxu0 0.0
    %163 = vmatprep.subr.mxu0 0.0
    %164 = vmatpush1.xpose.msra.mxu0 0.0
    %165 = vmatprep.subr.mxu0 0.0
    %166 = vmatpush1.xpose.msra.mxu0 0.0
    %167 = vmatprep.subr.mxu0 0.0
    %168 = vmatpush1.xpose.msra.mxu0 0.0
    %169 = vmatprep.subr.mxu0 0.0
    %170 = vmatpush1.xpose.msra.mxu0 0.0
    %171 = vmatprep.subr.mxu0 0.0
    %172 = vmatpush1.xpose.msra.mxu0 0.0
    %173 = vmatprep.subr.mxu0 0.0
    %174 = vmatpush1.xpose.msra.mxu0 0.0
    %175 = vmatprep.subr.mxu0 0.0
    %176 = vmatpush1.xpose.msra.mxu0 0.0
    %177 = vmatprep.subr.mxu0 0.0
    %178 = vmatpush1.xpose.msra.mxu0 0.0
    %179 = vmatprep.subr.mxu0 0.0
    %180 = vmatpush1.xpose.msra.mxu0 0.0
    %181 = vmatprep.subr.mxu0 0.0
    %182 = vmatpush1.xpose.msra.mxu0 0.0
    %183 = vmatprep.subr.mxu0 0.0
    %184 = vmatpush1.xpose.msra.mxu0 0.0
    %185 = vmatprep.subr.mxu0 0.0
    %186 = vmatpush1.xpose.msra.mxu0 0.0
    %187 = vmatprep.subr.mxu0 0.0
    %188 = vmatpush1.xpose.msra.mxu0 0.0
    %189 = vmatprep.subr.mxu0 0.0
    %190 = vmatpush1.xpose.msra.mxu0 0.0
    %191 = vmatprep.mubr.f32.mxu0 0.0
    %192 = vmatmul.mubr.f32.gmra.mrb[0].mxu0 %v68
    %v193 = vpop.f32.mrb[0].mxu0
    %v194 = vadd.f32 %v49, %v193
    %v195 = vpop.f32.mrb[0].mxu0
    %196 = vmatprep.mubr.f32.mxu0 0.0
    %197 = vmatmul.mubr.f32.gmra.mrb[0].mxu0 %v71
    %v198 = vpop.f32.mrb[0].mxu0
    %v199 = vadd.f32 %v54, %v198
    %v200 = vpop.f32.mrb[0].mxu0
    %201 = vmatprep.mubr.f32.mxu0 0.0
    %202 = vmatmul.mubr.f32.gmra.mrb[0].mxu0 %v74
    %v203 = vpop.f32.mrb[0].mxu0
    %v204 = vadd.f32 %v59, %v203
    %v205 = vpop.f32.mrb[0].mxu0
    %206 = vmatprep.mubr.f32.mxu0 0.0
    %207 = vmatmul.mubr.f32.gmra.mrb[0].mxu0 %v77
    %v208 = vpop.f32.mrb[0].mxu0
    %v209 = vadd.f32 %v64, %v208
    %v210 = vpop.f32.mrb[0].mxu0
    %211 = vdwg.mxu0
    %v212 = vsub.f32 0.0, %v194
    %v213 = vsub.f32 0.0, %v199
    %v214 = vsub.f32 0.0, %v204
    %v215 = vsub.f32 0.0, %v209
    %v216 = vmul.f32 %v212, 1.442695
    %v217 = vpow.pop %v216
    %v218 = vmul.f32 %v213, 1.442695
    %v219 = vpow.pop %v218
    %v220 = vmul.f32 %v214, 1.442695
    %v221 = vpow.pop %v220
    %v222 = vmul.f32 %v215, 1.442695
    %v223 = vpow.pop %v222
    %v224 = vadd.f32 %v217, 1.0
    %v225 = vadd.f32 %v219, 1.0
    %v226 = vadd.f32 %v221, 1.0
    %v227 = vadd.f32 %v223, 1.0
    %v228 = vrcp.pop %v224
    %v229 = vmul.f32 1.0, %v228
    %v230 = vrcp.pop %v225
    %v231 = vmul.f32 1.0, %v230
    %v232 = vrcp.pop %v226
    %v233 = vmul.f32 1.0, %v232
    %v234 = vrcp.pop %v227
    %v235 = vmul.f32 1.0, %v234
    %v236 = vld [vmem:[%s3] sm:$0x1]
    %s237 = sld [smem:[#allocation2]]
    %v238 = vstv %s237
    %vm239 = vcmask 261120
    %v241 = vsel %vm239, %v236, 0
    %243 = vmatprep.subr.mxu0 0.0
    %244 = vmatpush1.msra.mxu0 %v229
    %245 = vmatprep.subr.mxu0 0.0
    %246 = vmatpush1.msra.mxu0 %v231
    %247 = vmatprep.subr.mxu0 0.0
    %248 = vmatpush1.msra.mxu0 %v233
    %249 = vmatprep.subr.mxu0 0.0
    %250 = vmatpush1.msra.mxu0 %v235
    %251 = vmatprep.subr.mxu0 0.0
    %252 = vmatpush1.msra.mxu0 0.0
    %253 = vmatprep.subr.mxu0 0.0
    %254 = vmatpush1.msra.mxu0 0.0
    %255 = vmatprep.subr.mxu0 0.0
    %256 = vmatpush1.msra.mxu0 0.0
    %257 = vmatprep.subr.mxu0 0.0
    %258 = vmatpush1.msra.mxu0 0.0
    %259 = vmatprep.subr.mxu0 0.0
    %260 = vmatpush1.msra.mxu0 0.0
    %261 = vmatprep.subr.mxu0 0.0
    %262 = vmatpush1.msra.mxu0 0.0
    %263 = vmatprep.subr.mxu0 0.0
    %264 = vmatpush1.msra.mxu0 0.0
    %265 = vmatprep.subr.mxu0 0.0
    %266 = vmatpush1.msra.mxu0 0.0
    %267 = vmatprep.subr.mxu0 0.0
    %268 = vmatpush1.msra.mxu0 0.0
    %269 = vmatprep.subr.mxu0 0.0
    %270 = vmatpush1.msra.mxu0 0.0
    %271 = vmatprep.subr.mxu0 0.0
    %272 = vmatpush1.msra.mxu0 0.0
    %273 = vmatprep.subr.mxu0 0.0
    %274 = vmatpush1.msra.mxu0 0.0
    %275 = vmatprep.subr.mxu0 0.0
    %276 = vmatpush1.msra.mxu0 0.0
    %277 = vmatprep.subr.mxu0 0.0
    %278 = vmatpush1.msra.mxu0 0.0
    %279 = vmatprep.subr.mxu0 0.0
    %280 = vmatpush1.msra.mxu0 0.0
    %281 = vmatprep.subr.mxu0 0.0
    %282 = vmatpush1.msra.mxu0 0.0
    %283 = vmatprep.subr.mxu0 0.0
    %284 = vmatpush1.msra.mxu0 0.0
    %285 = vmatprep.subr.mxu0 0.0
    %286 = vmatpush1.msra.mxu0 0.0
    %287 = vmatprep.subr.mxu0 0.0
    %288 = vmatpush1.msra.mxu0 0.0
    %289 = vmatprep.subr.mxu0 0.0
    %290 = vmatpush1.msra.mxu0 0.0
    %291 = vmatprep.subr.mxu0 0.0
    %292 = vmatpush1.msra.mxu0 0.0
    %293 = vmatprep.subr.mxu0 0.0
    %294 = vmatpush1.msra.mxu0 0.0
    %295 = vmatprep.subr.mxu0 0.0
    %296 = vmatpush1.msra.mxu0 0.0
    %297 = vmatprep.subr.mxu0 0.0
    %298 = vmatpush1.msra.mxu0 0.0
    %299 = vmatprep.subr.mxu0 0.0
    %300 = vmatpush1.msra.mxu0 0.0
    %301 = vmatprep.subr.mxu0 0.0
    %302 = vmatpush1.msra.mxu0 0.0
    %303 = vmatprep.subr.mxu0 0.0
    %304 = vmatpush1.msra.mxu0 0.0
    %305 = vmatprep.subr.mxu0 0.0
    %306 = vmatpush1.msra.mxu0 0.0
    %307 = vmatprep.mubr.f32.mxu0 0.0
    %308 = vmatmul.mubr.f32.gmra.mrb[0].mxu0 %v241
    %v309 = vpop.f32.mrb[0].mxu0
    %v310 = vadd.f32 %v238, %v309
    %v311 = vpop.f32.mrb[0].mxu0
    %312 = vdwg.mxu0
    %313 = vst [vmem:[#allocation3] sm:$0x1] %v310
    // Predicated region
    $region22: #{tpu_custom_call.1} parent=1 // pred_check
      _
    $region23: #{tpu_custom_call.1} parent=1 // pred_check_branch
      %315 = sbr.rel (0) target = $region25
    $region24: #{tpu_custom_call.1} parent=1 // pred_region
      %s317 = ssub.s32 16, 16
      %318 = vsyncadd [#allocation4], %s317
      %s320 = sshll.u32 [#allocation3], 4
      %s321 = int_to_ptr.vmem [resolvable:$true] %s320
      %323 = dma.vmem_to_hbm [thread:$0]  %s321, 16, %s5, [#allocation4]
    $region25: #{tpu_custom_call.1} parent=1 // pred_fallthru
      _
    // Predicated region
    $region26: #{tpu_custom_call.1} parent=1 // pred_check
      _
    $region27: #{tpu_custom_call.1} parent=1 // pred_check_branch
      %325 = sbr.rel (0) target = $region29
    $region28: #{tpu_custom_call.1} parent=1 // pred_region
      %326 = dma.done [#allocation4], 16
    $region29: #{tpu_custom_call.1} parent=1 // pred_fallthru
      _
    %327 = vsyncpa [#allocation4], 1

</llo_original>
